<compile_context>
chip_gen: v5e
topology: v5e:2x2
jax: 0.10.0
libtpu: 0.0.40
codegen_flags: <defaults>
</compile_context>

<pallas_src>
import jax
import jax.numpy as jnp
from jax.experimental import pallas as pl
from jax.experimental.pallas import tpu as pltpu

NUM_SEGMENTS = 10
IN_DIM = 1 + NUM_SEGMENTS      # 11
IN_AUG = IN_DIM + 1            # 12: [x | mask | 1]  (ones column carries b1)
HIDDEN = 128
OUT_DIM = 1


def _round_up(n, m):
    return ((n + m - 1) // m) * m


def _mlp_kernel(h_ref, w1_ref, w2_ref, b2_ref, w3_ref, b3_ref, o_ref):
    # fc1 (+b1 via the appended ones column): bf16 operands, f32 accumulation.
    h1 = jnp.dot(h_ref[...], w1_ref[...], preferred_element_type=jnp.float32)
    h1 = jnp.maximum(h1, 0.0)                                        # [tb,128]

    # fc2: dominant 128x128 matmul -> bf16 operands, f32 accumulation.
    h2 = jnp.dot(h1.astype(jnp.bfloat16), w2_ref[...],
                 preferred_element_type=jnp.float32)
    h2 = jnp.maximum(h2 + b2_ref[...], 0.0)                          # [tb,128]

    # fc3 + tanh, all f32: weighted lane-reduce (VPU mul + XLU sum) instead of
    # a thin MXU matmul or a transposing einsum.  Output stays [tb, 1].
    y = jnp.sum(h2 * w3_ref[...], axis=-1, keepdims=True)            # [tb,1]
    o_ref[...] = jnp.tanh(y + b3_ref[...]).astype(o_ref.dtype)


def avoid_mask_nn_forward(x, mask_encoding, params, *, block_b=4096):
    """x: [B, 1] f32, mask_encoding: [B, NUM_SEGMENTS] f32 -> [B, 1] f32.

    block_b is the max rows per grid step; 4096 is safe on all generations
    (v7x: 64 MiB VMEM).  v5e/v6e (128 MiB) tolerate larger, but per-step
    overhead is already <1% at 4096 so there is little to gain.
    """
    w1, b1, w2, b2, w3, b3 = params
    B = x.shape[0]

    # Fused input tile: [x | mask | 1] so torch.cat AND the fc1 bias both ride
    # the (bf16) fc1 matmul.  bf16 cast here == casting the matmul operand
    # in-kernel, so no extra precision loss vs. a bf16 MXU dot.
    ones = jnp.ones((B, 1), jnp.float32)
    h = jnp.concatenate([x, mask_encoding, ones], axis=1).astype(jnp.bfloat16)
    w1_aug = jnp.concatenate([w1, b1], axis=0).astype(jnp.bfloat16)  # [12,128]
    w2_bf16 = w2.astype(jnp.bfloat16)                                # [128,128]
    w3_row = w3.reshape(1, HIDDEN)                                   # [1,128] f32

    # Balanced batch tiles (multiples of 128 rows).  Force an even number of
    # >=2 tiles when B >= 256 so v7x's two TensorCores both get work under the
    # "parallel" axis (extra ~0.35us step is noise on single-TC v5e/v6e).
    num_tiles = max(pl.cdiv(B, block_b), 2 if B >= 256 else 1)
    if num_tiles > 1 and num_tiles % 2:
        num_tiles += 1
    tb = _round_up(pl.cdiv(B, num_tiles), 128)
    padded_B = tb * num_tiles
    if padded_B != B:
        h = jnp.pad(h, ((0, padded_B - B), (0, 0)))   # zero rows, sliced off below

    const2d = lambda i: (0, 0)   # weights/biases stay VMEM-resident across steps

    out = pl.pallas_call(
        _mlp_kernel,
        out_shape=jax.ShapeDtypeStruct((padded_B, OUT_DIM), jnp.float32),
        grid=(num_tiles,),
        in_specs=[
            pl.BlockSpec((tb, IN_AUG), lambda i: (i, 0)),      # [x|mask|1] tile (bf16)
            pl.BlockSpec((IN_AUG, HIDDEN), const2d),           # [w1; b1]   (bf16)
            pl.BlockSpec((HIDDEN, HIDDEN), const2d),           # w2         (bf16)
            pl.BlockSpec((1, HIDDEN), const2d),                # b2         (f32)
            pl.BlockSpec((1, HIDDEN), const2d),                # w3 row     (f32)
            pl.BlockSpec((1, 1), const2d),                     # b3         (f32)
        ],
        out_specs=pl.BlockSpec((tb, OUT_DIM), lambda i: (i, 0)),
        compiler_params=pltpu.CompilerParams(
            dimension_semantics=("parallel",),   # shard batch over v7x's 2 TCs
            vmem_limit_bytes=48 << 20,
        ),
    )(h, w1_aug, w2_bf16, b2, w3_row, b3)

    return out[:B]


def init_params(key):
    """Deterministic init mimicking PyTorch nn.Linear default:
    U(-1/sqrt(fan_in), 1/sqrt(fan_in)). Weights stored as [in, out]."""
    def linear(k, fan_in, fan_out):
        kw, kb = jax.random.split(k)
        bound = 1.0 / jnp.sqrt(jnp.float32(fan_in))
        w = jax.random.uniform(kw, (fan_in, fan_out), jnp.float32, -bound, bound)
        b = jax.random.uniform(kb, (1, fan_out), jnp.float32, -bound, bound)
        return w, b

    k1, k2, k3 = jax.random.split(key, 3)
    w1, b1 = linear(k1, IN_DIM, HIDDEN)
    w2, b2 = linear(k2, HIDDEN, HIDDEN)
    w3, b3 = linear(k3, HIDDEN, OUT_DIM)
    return (w1, b1, w2, b2, w3, b3)


def reference_forward(x, mask_encoding, params):
    """Pure-JAX f32 reference with the original (PyTorch) semantics."""
    w1, b1, w2, b2, w3, b3 = params
    h = jnp.concatenate([x, mask_encoding], axis=1)
    h = jax.nn.relu(h @ w1 + b1)
    h = jax.nn.relu(h @ w2 + b2)
    return jnp.tanh(h @ w3 + b3)


if __name__ == "__main__":
    key = jax.random.PRNGKey(0)
    kp, kx, km = jax.random.split(key, 3)

    B = 8
    params = init_params(kp)
    x = jax.random.normal(kx, (B, 1), jnp.float32)
    mask_encoding = jax.random.normal(km, (B, NUM_SEGMENTS), jnp.float32)

    out = avoid_mask_nn_forward(x, mask_encoding, params)
    out = jax.block_until_ready(out)

    ref = reference_forward(x, mask_encoding, params)
    assert out.shape == (B, OUT_DIM)
    # fc1/fc2 run with bf16 operands (f32 accumulation) on the MXU; fc3 is
    # pure f32.  Observed error vs. the f32 reference is ~1e-3, so compare
    # with a relaxed tolerance.  For exact parity, drop the bf16 casts.
    assert jnp.allclose(out, ref, atol=2e-2, rtol=2e-2), "mismatch vs JAX reference"

    print("KERNEL_OK")
</pallas_src>

<mosaic_0001>
module attributes {stable_mosaic.version = 11 : i64} {
  func.func @_mlp_kernel(%arg0: i32, %arg1: memref<128x12xbf16, #tpu.memory_space<vmem>>, %arg2: memref<12x128xbf16, #tpu.memory_space<vmem>>, %arg3: memref<128x128xbf16, #tpu.memory_space<vmem>>, %arg4: memref<1x128xf32, #tpu.memory_space<vmem>>, %arg5: memref<1x128xf32, #tpu.memory_space<vmem>>, %arg6: memref<1x1xf32, #tpu.memory_space<vmem>>, %arg7: memref<128x1xf32, #tpu.memory_space<vmem>>) attributes {dimension_semantics = [#tpu.dimension_semantics<parallel>], iteration_bounds = array<i64: 1>, scalar_prefetch = 0 : i64, scratch_operands = 0 : i64, tpu.core_type = #tpu.core_type<tc>, window_params = [{transform_indices = @transform_0, window_bounds = array<i64: 128, 12>}, {pipeline_mode = #tpu.pipeline_mode<synchronous>, transform_indices = @transform_1, window_bounds = array<i64: 12, 128>}, {pipeline_mode = #tpu.pipeline_mode<synchronous>, transform_indices = @transform_2, window_bounds = array<i64: 128, 128>}, {pipeline_mode = #tpu.pipeline_mode<synchronous>, transform_indices = @transform_3, window_bounds = array<i64: 1, 128>}, {pipeline_mode = #tpu.pipeline_mode<synchronous>, transform_indices = @transform_4, window_bounds = array<i64: 1, 128>}, {pipeline_mode = #tpu.pipeline_mode<synchronous>, transform_indices = @transform_5, window_bounds = array<i64: 1, 1>}, {transform_indices = @transform_6, window_bounds = array<i64: 128, 1>}]} {
    %c0 = arith.constant 0 : index
    %c0_0 = arith.constant 0 : index
    %0 = vector.load %arg1[%c0, %c0_0] : memref<128x12xbf16, #tpu.memory_space<vmem>>, vector<128x12xbf16>
    %c0_1 = arith.constant 0 : index
    %c0_2 = arith.constant 0 : index
    %1 = vector.load %arg2[%c0_1, %c0_2] : memref<12x128xbf16, #tpu.memory_space<vmem>>, vector<12x128xbf16>
    %cst = arith.constant dense<0.000000e+00> : vector<128x128xf32>
    %2 = tpu.matmul %0, %1, %cst {dimension_numbers = #tpu.dot_dimension_numbers<[1], [0], [0], [1], [0, 0, 1, 1], [], []>} : vector<128x12xbf16>, vector<12x128xbf16>, vector<128x128xf32> -> vector<128x128xf32>
    %cst_3 = arith.constant 0.000000e+00 : f32
    %3 = vector.broadcast %cst_3 : f32 to vector<128x128xf32>
    %4 = arith.maximumf %2, %3 : vector<128x128xf32>
    %5 = arith.truncf %4 : vector<128x128xf32> to vector<128x128xbf16>
    %c0_4 = arith.constant 0 : index
    %c0_5 = arith.constant 0 : index
    %6 = vector.load %arg3[%c0_4, %c0_5] : memref<128x128xbf16, #tpu.memory_space<vmem>>, vector<128x128xbf16>
    %cst_6 = arith.constant dense<0.000000e+00> : vector<128x128xf32>
    %7 = tpu.matmul %5, %6, %cst_6 {dimension_numbers = #tpu.dot_dimension_numbers<[1], [0], [0], [1], [0, 0, 1, 1], [], []>} : vector<128x128xbf16>, vector<128x128xbf16>, vector<128x128xf32> -> vector<128x128xf32>
    %c0_7 = arith.constant 0 : index
    %c0_8 = arith.constant 0 : index
    %8 = vector.load %arg4[%c0_7, %c0_8] : memref<1x128xf32, #tpu.memory_space<vmem>>, vector<1x128xf32>
    %9 = vector.broadcast %8 : vector<1x128xf32> to vector<128x128xf32>
    %10 = arith.addf %7, %9 : vector<128x128xf32>
    %cst_9 = arith.constant 0.000000e+00 : f32
    %11 = vector.broadcast %cst_9 : f32 to vector<128x128xf32>
    %12 = arith.maximumf %10, %11 : vector<128x128xf32>
    %c0_10 = arith.constant 0 : index
    %c0_11 = arith.constant 0 : index
    %13 = vector.load %arg5[%c0_10, %c0_11] : memref<1x128xf32, #tpu.memory_space<vmem>>, vector<1x128xf32>
    %14 = vector.broadcast %13 : vector<1x128xf32> to vector<128x128xf32>
    %15 = arith.mulf %12, %14 : vector<128x128xf32>
    %cst_12 = arith.constant dense<0.000000e+00> : vector<128xf32>
    %16 = vector.multi_reduction <add>, %15, %cst_12 [1] : vector<128x128xf32> to vector<128xf32>
    %17 = vector.shape_cast %16 : vector<128xf32> to vector<128x1xf32>
    %c0_13 = arith.constant 0 : index
    %c0_14 = arith.constant 0 : index
    %18 = vector.load %arg6[%c0_13, %c0_14] : memref<1x1xf32, #tpu.memory_space<vmem>>, vector<1x1xf32>
    %19 = vector.broadcast %18 : vector<1x1xf32> to vector<128x1xf32>
    %20 = arith.addf %17, %19 : vector<128x1xf32>
    %21 = math.tanh %20 : vector<128x1xf32>
    %c0_15 = arith.constant 0 : index
    %c0_16 = arith.constant 0 : index
    %22 = vector.load %arg7[%c0_15, %c0_16] : memref<128x1xf32, #tpu.memory_space<vmem>>, vector<128x1xf32>
    tpu.vector_store %arg7[%c0_15, %c0_16], %21 {strides = array<i32>} : memref<128x1xf32, #tpu.memory_space<vmem>>, vector<128x1xf32>,
    return
  }
  func.func @transform_0(%arg0: i32) -> (i32, i32) {
    %c0_i32 = arith.constant 0 : i32
    %c0_i32_0 = arith.constant 0 : i32
    return %arg0, %c0_i32 : i32, i32
  }
  func.func @transform_1(%arg0: i32) -> (i32, i32) {
    %c0_i32 = arith.constant 0 : i32
    %c0_i32_0 = arith.constant 0 : i32
    %c0_i32_1 = arith.constant 0 : i32
    return %c0_i32, %c0_i32_0 : i32, i32
  }
  func.func @transform_2(%arg0: i32) -> (i32, i32) {
    %c0_i32 = arith.constant 0 : i32
    %c0_i32_0 = arith.constant 0 : i32
    %c0_i32_1 = arith.constant 0 : i32
    return %c0_i32, %c0_i32_0 : i32, i32
  }
  func.func @transform_3(%arg0: i32) -> (i32, i32) {
    %c0_i32 = arith.constant 0 : i32
    %c0_i32_0 = arith.constant 0 : i32
    %c0_i32_1 = arith.constant 0 : i32
    return %c0_i32, %c0_i32_0 : i32, i32
  }
  func.func @transform_4(%arg0: i32) -> (i32, i32) {
    %c0_i32 = arith.constant 0 : i32
    %c0_i32_0 = arith.constant 0 : i32
    %c0_i32_1 = arith.constant 0 : i32
    return %c0_i32, %c0_i32_0 : i32, i32
  }
  func.func @transform_5(%arg0: i32) -> (i32, i32) {
    %c0_i32 = arith.constant 0 : i32
    %c0_i32_0 = arith.constant 0 : i32
    %c0_i32_1 = arith.constant 0 : i32
    return %c0_i32, %c0_i32_0 : i32, i32
  }
  func.func @transform_6(%arg0: i32) -> (i32, i32) {
    %c0_i32 = arith.constant 0 : i32
    %c0_i32_0 = arith.constant 0 : i32
    return %arg0, %c0_i32 : i32, i32
  }
}

</mosaic_0001>

<llo_original>
// kernel: tpu_custom_call.1
$region0: #{tpu_custom_call.1}
  #allocation0 [shape = 'u32[]', space=smem, size = 0x4, offset = 0x4, fixed_abs, tag = 'smem constant byte address 0x4 - core index']
  #allocation1 [shape = 'u32[72,128]{1,0:T(1,128)}', space=vmem, size = 0x9000, scoped, tag = 'internal scratch']
  #allocation2 [shape = 'f32[1,1]{1,0:T(1,128)S(1)}', space=vmem, size = 0x200, scoped, tag = 'scoped memory for tpu_custom_call.1']
  %s0 = inlined_call_operand.vmem [shape: bf16[128,12], index: 0, kind: input, shape index: {}]
  %s1 = inlined_call_operand.vmem [shape: bf16[12,128], index: 1, kind: input, shape index: {}]
  %s2 = inlined_call_operand.vmem [shape: bf16[128,128], index: 2, kind: input, shape index: {}]
  %s3 = inlined_call_operand.vmem [shape: f32[1,128], index: 3, kind: input, shape index: {}]
  %s4 = inlined_call_operand.vmem [shape: f32[1,128], index: 4, kind: input, shape index: {}]
  %s5 = inlined_call_operand.<no memory space> [shape: f32[1,1], index: 5, kind: input, shape index: {}]
  %s6 = inlined_call_operand.vmem [shape: f32[128,1], index: 6, kind: output, shape index: {}]
  %s7 = sld [smem:[#allocation0]]
  $region34: #{tpu_custom_call.1} parent=0
    _
  %s9 = ssub.s32 1, %s7
  %s10 = scalar_select 0, %s9, %s7
  %v11 = vstv %s5
  %12 = vst [vmem:[#allocation2] sm:$0x1] %v11
  // Predicated region
  $region2: #{tpu_custom_call.1} parent=0 // pred_check
    _
  $region3: #{tpu_custom_call.1} parent=0 // pred_check_branch
    %14 = sbr.rel (0) target = $region5
  $region4: #{tpu_custom_call.1} parent=0 // pred_region
    _
  $region5: #{tpu_custom_call.1} parent=0 // pred_fallthru
    _
  // Predicated region
  $region6: #{tpu_custom_call.1} parent=0 // pred_check
    _
  $region7: #{tpu_custom_call.1} parent=0 // pred_check_branch
    %16 = sbr.rel (0) target = $region9
  $region8: #{tpu_custom_call.1} parent=0 // pred_region
    _
  $region9: #{tpu_custom_call.1} parent=0 // pred_fallthru
    _
  // Predicated region
  $region10: #{tpu_custom_call.1} parent=0 // pred_check
    _
  $region11: #{tpu_custom_call.1} parent=0 // pred_check_branch
    %18 = sbr.rel (0) target = $region13
  $region12: #{tpu_custom_call.1} parent=0 // pred_region
    _
  $region13: #{tpu_custom_call.1} parent=0 // pred_fallthru
    _
  // Predicated region
  $region14: #{tpu_custom_call.1} parent=0 // pred_check
    _
  $region15: #{tpu_custom_call.1} parent=0 // pred_check_branch
    %20 = sbr.rel (0) target = $region17
  $region16: #{tpu_custom_call.1} parent=0 // pred_region
    _
  $region17: #{tpu_custom_call.1} parent=0 // pred_fallthru
    _
  // Predicated region
  $region18: #{tpu_custom_call.1} parent=0 // pred_check
    _
  $region19: #{tpu_custom_call.1} parent=0 // pred_check_branch
    %22 = sbr.rel (0) target = $region21
  $region20: #{tpu_custom_call.1} parent=0 // pred_region
    _
  $region21: #{tpu_custom_call.1} parent=0 // pred_fallthru
    _
  // Predicated region
  $region22: #{tpu_custom_call.1} parent=0 // pred_check
    _
  $region23: #{tpu_custom_call.1} parent=0 // pred_check_branch
    %24 = sbr.rel (0) target = $region25
  $region24: #{tpu_custom_call.1} parent=0 // pred_region
    _
  $region25: #{tpu_custom_call.1} parent=0 // pred_fallthru
    _
  %v26 = vld [vmem:[%s0] sm:$0xf]
  %v27 = vld [vmem:[%s0 + $0x4] sm:$0xf]
  %v28 = vld [vmem:[%s0 + $0x8] sm:$0xf]
  %v29 = vld [vmem:[%s0 + $0xc] sm:$0xf]
  %v30 = vld [vmem:[%s0 + $0x10] sm:$0xf]
  %v31 = vld [vmem:[%s0 + $0x14] sm:$0xf]
  %v32 = vld [vmem:[%s0 + $0x18] sm:$0xf]
  %v33 = vld [vmem:[%s0 + $0x1c] sm:$0xf]
  %v34 = vld [vmem:[%s0 + $0x20] sm:$0xf]
  %v35 = vld [vmem:[%s0 + $0x24] sm:$0xf]
  %v36 = vld [vmem:[%s0 + $0x28] sm:$0xf]
  %v37 = vld [vmem:[%s0 + $0x2c] sm:$0xf]
  %v38 = vld [vmem:[%s0 + $0x30] sm:$0xf]
  %v39 = vld [vmem:[%s0 + $0x34] sm:$0xf]
  %v40 = vld [vmem:[%s0 + $0x38] sm:$0xf]
  %v41 = vld [vmem:[%s0 + $0x3c] sm:$0xf]
  %v42 = vld [vmem:[%s1] sm:$0xf]
  %v43 = vld [vmem:[%s1 + $0x4] sm:$0x3]
  %v60 = vunpack.c.l.b16 %v26
  %v61 = vunpack.c.l.b16 %v27
  %v62 = vunpack.c.l.b16 %v28
  %v63 = vunpack.c.l.b16 %v29
  %v64 = vunpack.c.l.b16 %v30
  %v65 = vunpack.c.l.b16 %v31
  %v66 = vunpack.c.l.b16 %v32
  %v67 = vunpack.c.l.b16 %v33
  %v68 = vunpack.c.l.b16 %v34
  %v69 = vunpack.c.l.b16 %v35
  %v70 = vunpack.c.l.b16 %v36
  %v71 = vunpack.c.l.b16 %v37
  %v72 = vunpack.c.l.b16 %v38
  %v73 = vunpack.c.l.b16 %v39
  %v74 = vunpack.c.l.b16 %v40
  %v75 = vunpack.c.l.b16 %v41
  %v76 = vpack.c.b16 %v61, %v60
  %v77 = vpack.c.b16 %v63, %v62
  %v78 = vpack.c.b16 %v65, %v64
  %v79 = vpack.c.b16 %v67, %v66
  %v80 = vpack.c.b16 %v69, %v68
  %v81 = vpack.c.b16 %v71, %v70
  %v82 = vpack.c.b16 %v73, %v72
  %v83 = vpack.c.b16 %v75, %v74
  %v86 = vunpack.c.l.b16 %v42
  %v87 = vunpack.c.l.b16 %v43
  %v88 = vpack.c.b16 %v87, %v86
  %vm89 = vcmask 97280
  %v91 = vsel %vm89, %v76, 0
  %v94 = vsel %vm89, %v77, 0
  %v97 = vsel %vm89, %v78, 0
  %v100 = vsel %vm89, %v79, 0
  %v103 = vsel %vm89, %v80, 0
  %v106 = vsel %vm89, %v81, 0
  %v109 = vsel %vm89, %v82, 0
  %v112 = vsel %vm89, %v83, 0
  %vm114 = vcmask 1045504
  %v116 = vsel %vm114, %v88, 0
  %118 = vmatpush.bf16.msra.mxu0 0
  %119 = vmatpush.bf16.msra.mxu0 0
  %120 = vmatpush.bf16.msra.mxu0 0
  %121 = vmatpush.bf16.msra.mxu0 0
  %122 = vmatpush.bf16.msra.mxu0 0
  %123 = vmatpush.bf16.msra.mxu0 0
  %124 = vmatpush.bf16.msra.mxu0 0
  %125 = vmatpush.bf16.msra.mxu0 %v116
  %126 = vmatmul.bf16.gmra.mxu0 %v91
  %v127 = vpop.f32.mrf.mxu0
  %v128 = vadd.f32 0.0, %v127
  %v129 = vpop.f32.mrf.mxu0
  %v130 = vadd.f32 0.0, %v129
  %131 = vmatmul.bf16.gmra.mxu0 %v94
  %v132 = vpop.f32.mrf.mxu0
  %v133 = vadd.f32 0.0, %v132
  %v134 = vpop.f32.mrf.mxu0
  %v135 = vadd.f32 0.0, %v134
  %136 = vmatmul.bf16.gmra.mxu0 %v97
  %v137 = vpop.f32.mrf.mxu0
  %v138 = vadd.f32 0.0, %v137
  %v139 = vpop.f32.mrf.mxu0
  %v140 = vadd.f32 0.0, %v139
  %141 = vmatmul.bf16.gmra.mxu0 %v100
  %v142 = vpop.f32.mrf.mxu0
  %v143 = vadd.f32 0.0, %v142
  %v144 = vpop.f32.mrf.mxu0
  %v145 = vadd.f32 0.0, %v144
  %146 = vmatmul.bf16.gmra.mxu0 %v103
  %v147 = vpop.f32.mrf.mxu0
  %v148 = vadd.f32 0.0, %v147
  %v149 = vpop.f32.mrf.mxu0
  %v150 = vadd.f32 0.0, %v149
  %151 = vmatmul.bf16.gmra.mxu0 %v106
  %v152 = vpop.f32.mrf.mxu0
  %v153 = vadd.f32 0.0, %v152
  %v154 = vpop.f32.mrf.mxu0
  %v155 = vadd.f32 0.0, %v154
  %156 = vmatmul.bf16.gmra.mxu0 %v109
  %v157 = vpop.f32.mrf.mxu0
  %v158 = vadd.f32 0.0, %v157
  %v159 = vpop.f32.mrf.mxu0
  %v160 = vadd.f32 0.0, %v159
  %161 = vmatmul.bf16.gmra.mxu0 %v112
  %v162 = vpop.f32.mrf.mxu0
  %v163 = vadd.f32 0.0, %v162
  %v164 = vpop.f32.mrf.mxu0
  %v165 = vadd.f32 0.0, %v164
  %166 = vdwg.mxu0
  %v167 = vmax.f32 %v128, 0.0
  %v168 = vmax.f32 %v130, 0.0
  %v169 = vmax.f32 %v133, 0.0
  %v170 = vmax.f32 %v135, 0.0
  %v171 = vmax.f32 %v138, 0.0
  %v172 = vmax.f32 %v140, 0.0
  %v173 = vmax.f32 %v143, 0.0
  %v174 = vmax.f32 %v145, 0.0
  %v175 = vmax.f32 %v148, 0.0
  %v176 = vmax.f32 %v150, 0.0
  %v177 = vmax.f32 %v153, 0.0
  %v178 = vmax.f32 %v155, 0.0
  %v179 = vmax.f32 %v158, 0.0
  %v180 = vmax.f32 %v160, 0.0
  %v181 = vmax.f32 %v163, 0.0
  %v182 = vmax.f32 %v165, 0.0
  %v183 = vpack.c.bf16 %v168, %v167
  %v184 = vpack.c.bf16 %v170, %v169
  %v185 = vpack.c.bf16 %v172, %v171
  %v186 = vpack.c.bf16 %v174, %v173
  %v187 = vpack.c.bf16 %v176, %v175
  %v188 = vpack.c.bf16 %v178, %v177
  %v189 = vpack.c.bf16 %v180, %v179
  %v190 = vpack.c.bf16 %v182, %v181
  %v191 = vld [vmem:[%s2] sm:$0xf]
  %v192 = vld [vmem:[%s2 + $0x4] sm:$0xf]
  %v193 = vld [vmem:[%s2 + $0x8] sm:$0xf]
  %v194 = vld [vmem:[%s2 + $0xc] sm:$0xf]
  %v195 = vld [vmem:[%s2 + $0x10] sm:$0xf]
  %v196 = vld [vmem:[%s2 + $0x14] sm:$0xf]
  %v197 = vld [vmem:[%s2 + $0x18] sm:$0xf]
  %v198 = vld [vmem:[%s2 + $0x1c] sm:$0xf]
  %v199 = vld [vmem:[%s2 + $0x20] sm:$0xf]
  %v200 = vld [vmem:[%s2 + $0x24] sm:$0xf]
  %v201 = vld [vmem:[%s2 + $0x28] sm:$0xf]
  %v202 = vld [vmem:[%s2 + $0x2c] sm:$0xf]
  %v203 = vld [vmem:[%s2 + $0x30] sm:$0xf]
  %v204 = vld [vmem:[%s2 + $0x34] sm:$0xf]
  %v205 = vld [vmem:[%s2 + $0x38] sm:$0xf]
  %v206 = vld [vmem:[%s2 + $0x3c] sm:$0xf]
  %v207 = vld [vmem:[%s3] sm:$0x1]
  %v209 = vperm.slane %v207, 0
  %v227 = vunpack.c.l.b16 %v191
  %v228 = vunpack.c.l.b16 %v192
  %v229 = vunpack.c.l.b16 %v193
  %v230 = vunpack.c.l.b16 %v194
  %v231 = vunpack.c.l.b16 %v195
  %v232 = vunpack.c.l.b16 %v196
  %v233 = vunpack.c.l.b16 %v197
  %v234 = vunpack.c.l.b16 %v198
  %v235 = vunpack.c.l.b16 %v199
  %v236 = vunpack.c.l.b16 %v200
  %v237 = vunpack.c.l.b16 %v201
  %v238 = vunpack.c.l.b16 %v202
  %v239 = vunpack.c.l.b16 %v203
  %v240 = vunpack.c.l.b16 %v204
  %v241 = vunpack.c.l.b16 %v205
  %v242 = vunpack.c.l.b16 %v206
  %v243 = vpack.c.b16 %v228, %v227
  %v244 = vpack.c.b16 %v230, %v229
  %v245 = vpack.c.b16 %v232, %v231
  %v246 = vpack.c.b16 %v234, %v233
  %v247 = vpack.c.b16 %v236, %v235
  %v248 = vpack.c.b16 %v238, %v237
  %v249 = vpack.c.b16 %v240, %v239
  %v250 = vpack.c.b16 %v242, %v241
  %259 = vmatpush.bf16.msra.mxu0 %v250
  %260 = vmatpush.bf16.msra.mxu0 %v249
  %261 = vmatpush.bf16.msra.mxu0 %v248
  %262 = vmatpush.bf16.msra.mxu0 %v247
  %263 = vmatpush.bf16.msra.mxu0 %v246
  %264 = vmatpush.bf16.msra.mxu0 %v245
  %265 = vmatpush.bf16.msra.mxu0 %v244
  %266 = vmatpush.bf16.msra.mxu0 %v243
  %267 = vmatmul.bf16.gmra.mxu0 %v183
  %v268 = vpop.f32.mrf.mxu0
  %v269 = vadd.f32 %v209, %v268
  %v270 = vpop.f32.mrf.mxu0
  %v271 = vadd.f32 %v209, %v270
  %272 = vmatmul.bf16.gmra.mxu0 %v184
  %v273 = vpop.f32.mrf.mxu0
  %v274 = vadd.f32 %v209, %v273
  %v275 = vpop.f32.mrf.mxu0
  %v276 = vadd.f32 %v209, %v275
  %277 = vmatmul.bf16.gmra.mxu0 %v185
  %v278 = vpop.f32.mrf.mxu0
  %v279 = vadd.f32 %v209, %v278
  %v280 = vpop.f32.mrf.mxu0
  %v281 = vadd.f32 %v209, %v280
  %282 = vmatmul.bf16.gmra.mxu0 %v186
  %v283 = vpop.f32.mrf.mxu0
  %v284 = vadd.f32 %v209, %v283
  %v285 = vpop.f32.mrf.mxu0
  %v286 = vadd.f32 %v209, %v285
  %287 = vmatmul.bf16.gmra.mxu0 %v187
  %v288 = vpop.f32.mrf.mxu0
  %v289 = vadd.f32 %v209, %v288
  %v290 = vpop.f32.mrf.mxu0
  %v291 = vadd.f32 %v209, %v290
  %292 = vmatmul.bf16.gmra.mxu0 %v188
  %v293 = vpop.f32.mrf.mxu0
  %v294 = vadd.f32 %v209, %v293
  %v295 = vpop.f32.mrf.mxu0
  %v296 = vadd.f32 %v209, %v295
  %297 = vmatmul.bf16.gmra.mxu0 %v189
  %v298 = vpop.f32.mrf.mxu0
  %v299 = vadd.f32 %v209, %v298
  %v300 = vpop.f32.mrf.mxu0
  %v301 = vadd.f32 %v209, %v300
  %302 = vmatmul.bf16.gmra.mxu0 %v190
  %v303 = vpop.f32.mrf.mxu0
  %v304 = vadd.f32 %v209, %v303
  %v305 = vpop.f32.mrf.mxu0
  %v306 = vadd.f32 %v209, %v305
  %307 = vdwg.mxu0
  %v308 = vmax.f32 %v269, 0.0
  %v309 = vmax.f32 %v271, 0.0
  %v310 = vmax.f32 %v274, 0.0
  %v311 = vmax.f32 %v276, 0.0
  %v312 = vmax.f32 %v279, 0.0
  %v313 = vmax.f32 %v281, 0.0
  %v314 = vmax.f32 %v284, 0.0
  %v315 = vmax.f32 %v286, 0.0
  %v316 = vmax.f32 %v289, 0.0
  %v317 = vmax.f32 %v291, 0.0
  %v318 = vmax.f32 %v294, 0.0
  %v319 = vmax.f32 %v296, 0.0
  %v320 = vmax.f32 %v299, 0.0
  %v321 = vmax.f32 %v301, 0.0
  %v322 = vmax.f32 %v304, 0.0
  %v323 = vmax.f32 %v306, 0.0
  %v324 = vld [vmem:[%s4] sm:$0x1]
  %v326 = vperm.slane %v324, 0
  %v328 = vmul.f32 %v308, %v326
  %v329 = vmul.f32 %v309, %v326
  %v330 = vmul.f32 %v310, %v326
  %v331 = vmul.f32 %v311, %v326
  %v332 = vmul.f32 %v312, %v326
  %v333 = vmul.f32 %v313, %v326
  %v334 = vmul.f32 %v314, %v326
  %v335 = vmul.f32 %v315, %v326
  %v336 = vmul.f32 %v316, %v326
  %v337 = vmul.f32 %v317, %v326
  %v338 = vmul.f32 %v318, %v326
  %v339 = vmul.f32 %v319, %v326
  %v340 = vmul.f32 %v320, %v326
  %v341 = vmul.f32 %v321, %v326
  %v342 = vmul.f32 %v322, %v326
  %v343 = vmul.f32 %v323, %v326
  %344 = vadd.xlane.f32.xlu0 %v328
  %v345 = vpop.xlane.xlu0 %344
  %346 = vadd.xlane.f32.xlu0 %v329
  %v347 = vpop.xlane.xlu0 %346
  %348 = vadd.xlane.f32.xlu0 %v330
  %v349 = vpop.xlane.xlu0 %348
  %350 = vadd.xlane.f32.xlu0 %v331
  %v351 = vpop.xlane.xlu0 %350
  %352 = vadd.xlane.f32.xlu0 %v332
  %v353 = vpop.xlane.xlu0 %352
  %354 = vadd.xlane.f32.xlu0 %v333
  %v355 = vpop.xlane.xlu0 %354
  %356 = vadd.xlane.f32.xlu0 %v334
  %v357 = vpop.xlane.xlu0 %356
  %358 = vadd.xlane.f32.xlu0 %v335
  %v359 = vpop.xlane.xlu0 %358
  %360 = vadd.xlane.f32.xlu0 %v336
  %v361 = vpop.xlane.xlu0 %360
  %362 = vadd.xlane.f32.xlu0 %v337
  %v363 = vpop.xlane.xlu0 %362
  %364 = vadd.xlane.f32.xlu0 %v338
  %v365 = vpop.xlane.xlu0 %364
  %366 = vadd.xlane.f32.xlu0 %v339
  %v367 = vpop.xlane.xlu0 %366
  %368 = vadd.xlane.f32.xlu0 %v340
  %v369 = vpop.xlane.xlu0 %368
  %370 = vadd.xlane.f32.xlu0 %v341
  %v371 = vpop.xlane.xlu0 %370
  %372 = vadd.xlane.f32.xlu0 %v342
  %v373 = vpop.xlane.xlu0 %372
  %374 = vadd.xlane.f32.xlu0 %v343
  %v375 = vpop.xlane.xlu0 %374
  %v376 = vld [vmem:[#allocation2] sm:$0x1]
  %v378 = vperm.slane %v376, 0
  %v380 = vadd.f32 %v345, %v378
  %v381 = vadd.f32 %v347, %v378
  %v382 = vadd.f32 %v349, %v378
  %v383 = vadd.f32 %v351, %v378
  %v384 = vadd.f32 %v353, %v378
  %v385 = vadd.f32 %v355, %v378
  %v386 = vadd.f32 %v357, %v378
  %v387 = vadd.f32 %v359, %v378
  %v388 = vadd.f32 %v361, %v378
  %v389 = vadd.f32 %v363, %v378
  %v390 = vadd.f32 %v365, %v378
  %v391 = vadd.f32 %v367, %v378
  %v392 = vadd.f32 %v369, %v378
  %v393 = vadd.f32 %v371, %v378
  %v394 = vadd.f32 %v373, %v378
  %v395 = vadd.f32 %v375, %v378
  %v396 = vtanh.pop %v380
  %v397 = vtanh.pop %v381
  %v398 = vtanh.pop %v382
  %v399 = vtanh.pop %v383
  %v400 = vtanh.pop %v384
  %v401 = vtanh.pop %v385
  %v402 = vtanh.pop %v386
  %v403 = vtanh.pop %v387
  %v404 = vtanh.pop %v388
  %v405 = vtanh.pop %v389
  %v406 = vtanh.pop %v390
  %v407 = vtanh.pop %v391
  %v408 = vtanh.pop %v392
  %v409 = vtanh.pop %v393
  %v410 = vtanh.pop %v394
  %v411 = vtanh.pop %v395
  %vm412 = vcmask 7168
  %413 = vst.msk [vmem:[%s6] sm:$0xff] %vm412, %v396
  %414 = vst.msk [vmem:[%s6 + $0x8] sm:$0xff] %vm412, %v397
  %415 = vst.msk [vmem:[%s6 + $0x10] sm:$0xff] %vm412, %v398
  %416 = vst.msk [vmem:[%s6 + $0x18] sm:$0xff] %vm412, %v399
  %417 = vst.msk [vmem:[%s6 + $0x20] sm:$0xff] %vm412, %v400
  %418 = vst.msk [vmem:[%s6 + $0x28] sm:$0xff] %vm412, %v401
  %419 = vst.msk [vmem:[%s6 + $0x30] sm:$0xff] %vm412, %v402
  %420 = vst.msk [vmem:[%s6 + $0x38] sm:$0xff] %vm412, %v403
  %421 = vst.msk [vmem:[%s6 + $0x40] sm:$0xff] %vm412, %v404
  %422 = vst.msk [vmem:[%s6 + $0x48] sm:$0xff] %vm412, %v405
  %423 = vst.msk [vmem:[%s6 + $0x50] sm:$0xff] %vm412, %v406
  %424 = vst.msk [vmem:[%s6 + $0x58] sm:$0xff] %vm412, %v407
  %425 = vst.msk [vmem:[%s6 + $0x60] sm:$0xff] %vm412, %v408
  %426 = vst.msk [vmem:[%s6 + $0x68] sm:$0xff] %vm412, %v409
  %427 = vst.msk [vmem:[%s6 + $0x70] sm:$0xff] %vm412, %v410
  %428 = vst.msk [vmem:[%s6 + $0x78] sm:$0xff] %vm412, %v411
  // Predicated region
  $region26: #{tpu_custom_call.1} parent=0 // pred_check
    _
  $region27: #{tpu_custom_call.1} parent=0 // pred_check_branch
    %430 = sbr.rel (0) target = $region29
  $region28: #{tpu_custom_call.1} parent=0 // pred_region
    _
  $region29: #{tpu_custom_call.1} parent=0 // pred_fallthru
    _
  // Predicated region
  $region30: #{tpu_custom_call.1} parent=0 // pred_check
    _
  $region31: #{tpu_custom_call.1} parent=0 // pred_check_branch
    %432 = sbr.rel (0) target = $region33
  $region32: #{tpu_custom_call.1} parent=0 // pred_region
    _
  $region33: #{tpu_custom_call.1} parent=0 // pred_fallthru
    _

</llo_original>
